<compile_context>
chip_gen: v7x
topology: tpu7x:2x2x1
jax: 0.10.0
libtpu: 0.0.40
codegen_flags: <defaults>
</compile_context>

<pallas_src>
import functools

import jax
import jax.numpy as jnp
from jax.experimental import pallas as pl
from jax.experimental.pallas import tpu as pltpu


def _round_up(v, m):
    return ((v + m - 1) // m) * m


def _cdiv(a, b):
    return (a + b - 1) // b


def _vmem_bytes_estimate(block_n, H, x_bytes, y_bytes, mm_bytes, out_bytes):
    """Rough VMEM footprint (with (8,128) tile padding): pipeline buffers plus
    the in-kernel intermediates (x cast, f32 matmul result, f32 product)."""
    h_lane = _round_up(H, 128)
    x_buf = 2 * block_n * h_lane * x_bytes            # x: double-buffered, native dtype
    y_buf = 2 * block_n * h_lane * y_bytes            # y: double-buffered, native dtype
    w_buf = 2 * _round_up(H, 8) * h_lane * mm_bytes   # W: 2 bufs allocated, DMA'd once
    o_buf = 2 * block_n * 128 * out_bytes             # (block_n, 1) tile pads to 128 lanes
    scratch = block_n * h_lane * (mm_bytes + 4 + 4)   # x cast + f32 t + f32 t*y
    return x_buf + y_buf + w_buf + o_buf + scratch


def _bilinear_head_kernel(x_ref, y_ref, w_ref, b_ref, o_ref, *, matmul_dtype):
    # x_ref : (block_n, H) tile, native input dtype (cast to MXU dtype here;
    #         the VPU cast is free filler under the DMA-bound main loop)
    # y_ref : (block_n, H) tile, native input dtype (upcast to f32 for reduce)
    # w_ref : (H, H) resident weight in the MXU dtype (constant block index)
    # b_ref : (1,) f32 scalar in SMEM
    # o_ref : (block_n, 1) output tile
    t = jnp.dot(x_ref[...].astype(matmul_dtype), w_ref[...],
                preferred_element_type=jnp.float32)
    s = jnp.sum(t * y_ref[...].astype(jnp.float32), axis=-1, keepdims=True)
    o_ref[...] = (s + b_ref[0]).astype(o_ref.dtype)


def vlbert_image_head(x, y, weight, bias, *, block_n=2048, matmul_dtype=None):
    """Bilinear head: x, y -> scores of shape x.shape[:-1] + (1,).

    x, y   : (..., H)  (pass bf16 activations straight through for the
                        2-byte HBM path; the wrapper never casts them)
    weight : (1, H, H) or (H, H)   (nn.Bilinear weight, out_features=1)
    bias   : (1,)
    """
    assert x.shape == y.shape, (x.shape, y.shape)
    H = x.shape[-1]
    lead = x.shape[:-1]
    out_dtype = x.dtype

    if matmul_dtype is None:
        # bf16 MXU operands (f32 accumulation) for production-sized hidden
        # dims.  Tiny H keeps the input precision: the matmul is overhead
        # dominated there and accuracy matters more.  User-overridable.
        matmul_dtype = jnp.bfloat16 if H >= 128 else x.dtype

    xf = x.reshape(-1, H)   # NOTE: no dtype cast here (avoids an extra HBM pass)
    yf = y.reshape(-1, H)
    N = xf.shape[0]

    x_bytes = jnp.dtype(xf.dtype).itemsize
    y_bytes = jnp.dtype(yf.dtype).itemsize
    mm_bytes = jnp.dtype(matmul_dtype).itemsize
    out_bytes = jnp.dtype(out_dtype).itemsize

    # ---- choose the row-tile size -------------------------------------------
    # Multiple of 128, no larger than needed for small N, and within a
    # conservative VMEM budget (v7x: 64 MiB physical per TensorCore).
    block_n = max(128, _round_up(min(block_n, _round_up(max(N, 1), 128)), 128))
    vmem_budget = 40 * 1024 * 1024
    while block_n > 128 and _vmem_bytes_estimate(
            block_n, H, x_bytes, y_bytes, mm_bytes, out_bytes) > vmem_budget:
        block_n = _round_up(block_n // 2, 128)
    # Keep at least two row blocks when there is enough work so the "parallel"
    # grid axis can feed both TensorCores on v7x (harmless elsewhere).
    if N > 128:
        block_n = max(128, min(block_n, _round_up(_cdiv(N, 2), 128)))

    # No jnp.pad: the partial last block reads garbage past N (row-independent
    # math, so valid rows are unaffected) and OOB output rows are dropped.
    grid_n = _cdiv(N, block_n)

    w_mm = weight.reshape(H, H).astype(matmul_dtype)   # tiny one-time cast
    b_f32 = bias.reshape(1).astype(jnp.float32)

    cost = pl.CostEstimate(
        flops=2 * N * H * H + 2 * N * H,
        transcendentals=0,
        bytes_accessed=(N * H * (x_bytes + y_bytes)
                        + H * H * mm_bytes
                        + N * out_bytes),
    )

    kernel = functools.partial(_bilinear_head_kernel, matmul_dtype=matmul_dtype)

    out = pl.pallas_call(
        kernel,
        out_shape=jax.ShapeDtypeStruct((N, 1), out_dtype),
        grid_spec=pltpu.PrefetchScalarGridSpec(
            num_scalar_prefetch=0,
            grid=(grid_n,),
            in_specs=[
                pl.BlockSpec((block_n, H), lambda i: (i, 0)),        # x tile (native dtype)
                pl.BlockSpec((block_n, H), lambda i: (i, 0)),        # y tile (native dtype)
                pl.BlockSpec((H, H), lambda i: (0, 0)),              # W (resident, fetched once/core)
                pl.BlockSpec(memory_space=pltpu.MemorySpace.SMEM),   # bias scalar
            ],
            out_specs=pl.BlockSpec((block_n, 1), lambda i: (i, 0)),
        ),
        compiler_params=pltpu.CompilerParams(
            dimension_semantics=("parallel",),       # shard row blocks across v7x's 2 TCs
            vmem_limit_bytes=48 * 1024 * 1024,
        ),
        cost_estimate=cost,
    )(xf, yf, w_mm, b_f32)

    return out.reshape(lead + (1,))


if __name__ == "__main__":
    key = jax.random.PRNGKey(0)
    keys = jax.random.split(key, 12)

    # --- test 1: module-consistent small shape (batch=2, seq=8, hidden=32, f32) ---
    B, S, H = 2, 8, 32
    x = jax.random.normal(keys[0], (B, S, H), dtype=jnp.float32)
    y = jax.random.normal(keys[1], (B, S, H), dtype=jnp.float32)
    bound = 1.0 / (H ** 0.5)
    weight = jax.random.uniform(keys[2], (1, H, H), jnp.float32, -bound, bound)
    bias = jax.random.uniform(keys[3], (1,), jnp.float32, -bound, bound)

    out = jax.block_until_ready(vlbert_image_head(x, y, weight, bias))
    ref = jnp.einsum("bsi,ij,bsj->bs", x, weight[0], y)[..., None] + bias[0]
    assert out.shape == (B, S, 1), out.shape
    assert jnp.allclose(out, ref, atol=1e-4, rtol=1e-4), (
        float(jnp.max(jnp.abs(out - ref))))

    # --- test 2: bf16-MXU path, grid_n >= 2 with a partial (masked) last block ---
    #             N = 8*25 = 200 rows, H = 256
    B2, S2, H2 = 8, 25, 256
    x2 = jax.random.normal(keys[4], (B2, S2, H2), dtype=jnp.float32)
    y2 = jax.random.normal(keys[5], (B2, S2, H2), dtype=jnp.float32)
    bound2 = 1.0 / (H2 ** 0.5)
    w2 = jax.random.uniform(keys[6], (1, H2, H2), jnp.float32, -bound2, bound2)
    b2 = jax.random.uniform(keys[7], (1,), jnp.float32, -bound2, bound2)

    out2 = jax.block_until_ready(vlbert_image_head(x2, y2, w2, b2))
    ref2 = jnp.einsum("bsi,ij,bsj->bs", x2, w2[0], y2)[..., None] + b2[0]
    assert out2.shape == (B2, S2, 1), out2.shape
    # bf16 MXU operands with f32 accumulation vs f32 reference.
    assert jnp.allclose(out2, ref2, atol=0.3, rtol=0.05), (
        float(jnp.max(jnp.abs(out2 - ref2))))

    # --- test 3: bf16 activations passed straight through (2-byte HBM path) ---
    B3, S3, H3 = 2, 8, 128
    x3 = jax.random.normal(keys[8], (B3, S3, H3), dtype=jnp.bfloat16)
    y3 = jax.random.normal(keys[9], (B3, S3, H3), dtype=jnp.bfloat16)
    bound3 = 1.0 / (H3 ** 0.5)
    w3 = jax.random.uniform(keys[10], (1, H3, H3), jnp.float32, -bound3, bound3)
    b3 = jax.random.uniform(keys[11], (1,), jnp.float32, -bound3, bound3)

    out3 = jax.block_until_ready(vlbert_image_head(x3, y3, w3, b3))
    ref3 = (jnp.einsum("bsi,ij,bsj->bs", x3.astype(jnp.float32), w3[0],
                       y3.astype(jnp.float32))[..., None] + b3[0])
    assert out3.shape == (B3, S3, 1), out3.shape
    assert jnp.allclose(out3.astype(jnp.float32), ref3, atol=0.3, rtol=0.05), (
        float(jnp.max(jnp.abs(out3.astype(jnp.float32) - ref3))))

    print("KERNEL_OK")
</pallas_src>

<mosaic_0001>
module attributes {stable_mosaic.version = 11 : i64} {
  func.func @_bilinear_head_kernel(%arg0: i32, %arg1: memref<128x32xf32, #tpu.memory_space<vmem>>, %arg2: memref<128x32xf32, #tpu.memory_space<vmem>>, %arg3: memref<32x32xf32, #tpu.memory_space<vmem>>, %arg4: memref<1xf32, #tpu.memory_space<smem>>, %arg5: memref<128x1xf32, #tpu.memory_space<vmem>>) attributes {dimension_semantics = [#tpu.dimension_semantics<parallel>], iteration_bounds = array<i64: 1>, scalar_prefetch = 0 : i64, scratch_operands = 0 : i64, tpu.core_type = #tpu.core_type<tc>, window_params = [{transform_indices = @transform_0, window_bounds = array<i64: 128, 32>}, {transform_indices = @transform_1, window_bounds = array<i64: 128, 32>}, {pipeline_mode = #tpu.pipeline_mode<synchronous>, transform_indices = @transform_2, window_bounds = array<i64: 32, 32>}, {transform_indices = @transform_3, window_bounds = array<i64: 1>}, {transform_indices = @transform_4, window_bounds = array<i64: 128, 1>}]} {
    %c0 = arith.constant 0 : index
    %c0_0 = arith.constant 0 : index
    %0 = vector.load %arg1[%c0, %c0_0] : memref<128x32xf32, #tpu.memory_space<vmem>>, vector<128x32xf32>
    %c0_1 = arith.constant 0 : index
    %c0_2 = arith.constant 0 : index
    %1 = vector.load %arg3[%c0_1, %c0_2] : memref<32x32xf32, #tpu.memory_space<vmem>>, vector<32x32xf32>
    %cst = arith.constant dense<0.000000e+00> : vector<128x32xf32>
    %2 = tpu.matmul %0, %1, %cst {dimension_numbers = #tpu.dot_dimension_numbers<[1], [0], [0], [1], [0, 0, 1, 1], [], []>} : vector<128x32xf32>, vector<32x32xf32>, vector<128x32xf32> -> vector<128x32xf32>
    %c0_3 = arith.constant 0 : index
    %c0_4 = arith.constant 0 : index
    %3 = vector.load %arg2[%c0_3, %c0_4] : memref<128x32xf32, #tpu.memory_space<vmem>>, vector<128x32xf32>
    %4 = arith.mulf %2, %3 : vector<128x32xf32>
    %cst_5 = arith.constant dense<0.000000e+00> : vector<128xf32>
    %5 = vector.multi_reduction <add>, %4, %cst_5 [1] : vector<128x32xf32> to vector<128xf32>
    %6 = vector.shape_cast %5 : vector<128xf32> to vector<128x1xf32>
    %c0_6 = arith.constant 0 : index
    %7 = memref.load %arg4[%c0_6] : memref<1xf32, #tpu.memory_space<smem>>
    %8 = vector.broadcast %7 : f32 to vector<128x1xf32>
    %9 = arith.addf %6, %8 : vector<128x1xf32>
    %c0_7 = arith.constant 0 : index
    %c0_8 = arith.constant 0 : index
    %10 = vector.load %arg5[%c0_7, %c0_8] : memref<128x1xf32, #tpu.memory_space<vmem>>, vector<128x1xf32>
    tpu.vector_store %arg5[%c0_7, %c0_8], %9 {strides = array<i32>} : memref<128x1xf32, #tpu.memory_space<vmem>>, vector<128x1xf32>,
    return
  }
  func.func @transform_0(%arg0: i32) -> (i32, i32) {
    %c0_i32 = arith.constant 0 : i32
    %c0_i32_0 = arith.constant 0 : i32
    return %arg0, %c0_i32 : i32, i32
  }
  func.func @transform_1(%arg0: i32) -> (i32, i32) {
    %c0_i32 = arith.constant 0 : i32
    %c0_i32_0 = arith.constant 0 : i32
    return %arg0, %c0_i32 : i32, i32
  }
  func.func @transform_2(%arg0: i32) -> (i32, i32) {
    %c0_i32 = arith.constant 0 : i32
    %c0_i32_0 = arith.constant 0 : i32
    %c0_i32_1 = arith.constant 0 : i32
    return %c0_i32, %c0_i32_0 : i32, i32
  }
  func.func @transform_3(%arg0: i32) -> i32 {
    %c0_i32 = arith.constant 0 : i32
    %c0_i32_0 = arith.constant 0 : i32
    return %c0_i32 : i32
  }
  func.func @transform_4(%arg0: i32) -> (i32, i32) {
    %c0_i32 = arith.constant 0 : i32
    %c0_i32_0 = arith.constant 0 : i32
    return %arg0, %c0_i32 : i32, i32
  }
}

</mosaic_0001>

<llo_original>
// kernel: tpu_custom_call.1
$region0: #{tpu_custom_call.1}
  #allocation0 [shape = 'u32[]', space=smem, size = 0x4, offset = 0x4, fixed_abs, tag = 'smem constant byte address 0x4 - core index']
  #allocation1 [shape = 'u32[144,128]{1,0:T(1,128)}', space=vmem, size = 0x12000, scoped, tag = 'internal scratch']
  #allocation2 [shape = 'f32[1]{0:T(128)S(6)}', space=smem, size = 0x200, scoped, tag = 'scoped memory for tpu_custom_call.1']
  %s0 = inlined_call_operand.hbm [shape: f32[16,32], index: 0, kind: input, shape index: {}]
  %s1 = inlined_call_operand.hbm [shape: f32[16,32], index: 1, kind: input, shape index: {}]
  %s2 = inlined_call_operand.hbm [shape: f32[32,32], index: 2, kind: input, shape index: {}]
  %s3 = inlined_call_operand.<no memory space> [shape: f32[1], index: 3, kind: input, shape index: {}]
  %s4 = inlined_call_operand.vmem [shape: f32[16,1], index: 4, kind: output, shape index: {}]
  %s5 = sld [smem:[#allocation0]]
  $region72: #{tpu_custom_call.1} parent=0
    _
  %s7 = ssub.s32 1, %s5
  %s8 = scalar_select 0, %s7, %s5
  %9 = sst [smem:[#allocation2]] %s3
  $region1: #{tpu_custom_call.1} parent=0
    #allocation3 [shape = 'u8[65536]{0}', space=vmem, size = 0x10000, scoped, tag = 'input window, operand 0, single buffered']
    #allocation4 [shape = 's32[1]{0}', space=sflag, size = 0x4, scoped, tag = 'scoped memory for tpu_custom_call.1']
    #allocation5 [shape = 'u8[65536]{0}', space=vmem, size = 0x10000, scoped, tag = 'input window, operand 1, single buffered']
    #allocation6 [shape = 's32[1]{0}', space=sflag, size = 0x4, scoped, tag = 'scoped memory for tpu_custom_call.1']
    #allocation7 [shape = 'u8[16384]{0}', space=vmem, size = 0x4000, scoped, tag = 'input window, operand 2, single buffered']
    #allocation8 [shape = 'u8[65536]{0}', space=vmem, size = 0x10000, scoped, tag = 'output window, operand 0, single buffered']
    %10 = vsyncpa [#allocation4], 0
    %11 = vsyncpa [#allocation6], 0
    // Predicated region
    $region2: #{tpu_custom_call.1} parent=1 // pred_check
      _
    $region3: #{tpu_custom_call.1} parent=1 // pred_check_branch
      %13 = sbr.rel (0) target = $region5
    $region4: #{tpu_custom_call.1} parent=1 // pred_region
      %s15 = ssub.s32 2048, 256
      %16 = vsyncadd [#allocation4], %s15
      %s17 = sshll.u32 [#allocation3], 4
      %s18 = int_to_ptr.vmem [resolvable:$true] %s17
      %23 = dma.hbm_to_vmem [thread:$0]  %s0, 256, %s18, [#allocation4], 128, 128, 8
    $region5: #{tpu_custom_call.1} parent=1 // pred_fallthru
      _
    // Predicated region
    $region6: #{tpu_custom_call.1} parent=1 // pred_check
      _
    $region7: #{tpu_custom_call.1} parent=1 // pred_check_branch
      %25 = sbr.rel (0) target = $region9
    $region8: #{tpu_custom_call.1} parent=1 // pred_region
      %s27 = ssub.s32 2048, 256
      %28 = vsyncadd [#allocation6], %s27
      %s29 = sshll.u32 [#allocation5], 4
      %s30 = int_to_ptr.vmem [resolvable:$true] %s29
      %35 = dma.hbm_to_vmem [thread:$0]  %s1, 256, %s30, [#allocation6], 128, 128, 8
    $region9: #{tpu_custom_call.1} parent=1 // pred_fallthru
      _
    // Predicated region
    $region10: #{tpu_custom_call.1} parent=1 // pred_check
      _
    $region11: #{tpu_custom_call.1} parent=1 // pred_check_branch
      %37 = sbr.rel (0) target = $region13
    $region12: #{tpu_custom_call.1} parent=1 // pred_region
      %s39 = ssub.s32 512, 512
      %40 = vsyncadd [#allocation6], %s39
      %s41 = sshll.u32 [#allocation7], 4
      %s42 = int_to_ptr.vmem [resolvable:$true] %s41
      %47 = dma.hbm_to_vmem [thread:$0]  %s2, 512, %s42, [#allocation6], 128, 128, 8
    $region13: #{tpu_custom_call.1} parent=1 // pred_fallthru
      _
    // Predicated region
    $region14: #{tpu_custom_call.1} parent=1 // pred_check
      _
    $region15: #{tpu_custom_call.1} parent=1 // pred_check_branch
      %49 = sbr.rel (0) target = $region17
    $region16: #{tpu_custom_call.1} parent=1 // pred_region
      _
    $region17: #{tpu_custom_call.1} parent=1 // pred_fallthru
      _
    // Predicated region
    $region18: #{tpu_custom_call.1} parent=1 // pred_check
      _
    $region19: #{tpu_custom_call.1} parent=1 // pred_check_branch
      %51 = sbr.rel (0) target = $region21
    $region20: #{tpu_custom_call.1} parent=1 // pred_region
      %52 = dma.done [#allocation4], 2048
    $region21: #{tpu_custom_call.1} parent=1 // pred_fallthru
      _
    // Predicated region
    $region22: #{tpu_custom_call.1} parent=1 // pred_check
      _
    $region23: #{tpu_custom_call.1} parent=1 // pred_check_branch
      %54 = sbr.rel (0) target = $region25
    $region24: #{tpu_custom_call.1} parent=1 // pred_region
      %55 = dma.done [#allocation6], 2048
    $region25: #{tpu_custom_call.1} parent=1 // pred_fallthru
      _
    // Predicated region
    $region26: #{tpu_custom_call.1} parent=1 // pred_check
      _
    $region27: #{tpu_custom_call.1} parent=1 // pred_check_branch
      %57 = sbr.rel (0) target = $region29
    $region28: #{tpu_custom_call.1} parent=1 // pred_region
      %58 = dma.done [#allocation6], 512
    $region29: #{tpu_custom_call.1} parent=1 // pred_fallthru
      _
    %v59 = vld [vmem:[#allocation3] sm:$0xff]
    %v60 = vld [vmem:[#allocation3 + $0x8] sm:$0xff]
    %v61 = vld [vmem:[#allocation3 + $0x10] sm:$0xff]
    %v62 = vld [vmem:[#allocation3 + $0x18] sm:$0xff]
    %v63 = vld [vmem:[#allocation3 + $0x20] sm:$0xff]
    %v64 = vld [vmem:[#allocation3 + $0x28] sm:$0xff]
    %v65 = vld [vmem:[#allocation3 + $0x30] sm:$0xff]
    %v66 = vld [vmem:[#allocation3 + $0x38] sm:$0xff]
    %v67 = vld [vmem:[#allocation3 + $0x40] sm:$0xff]
    %v68 = vld [vmem:[#allocation3 + $0x48] sm:$0xff]
    %v69 = vld [vmem:[#allocation3 + $0x50] sm:$0xff]
    %v70 = vld [vmem:[#allocation3 + $0x58] sm:$0xff]
    %v71 = vld [vmem:[#allocation3 + $0x60] sm:$0xff]
    %v72 = vld [vmem:[#allocation3 + $0x68] sm:$0xff]
    %v73 = vld [vmem:[#allocation3 + $0x70] sm:$0xff]
    %v74 = vld [vmem:[#allocation3 + $0x78] sm:$0xff]
    %v75 = vld [vmem:[#allocation7] sm:$0xff]
    %v76 = vld [vmem:[#allocation7 + $0x8] sm:$0xff]
    %v77 = vld [vmem:[#allocation7 + $0x10] sm:$0xff]
    %v78 = vld [vmem:[#allocation7 + $0x18] sm:$0xff]
    %vm79 = vcmask 261120
    %v81 = vsel %vm79, %v59, 0
    %v84 = vsel %vm79, %v60, 0
    %v87 = vsel %vm79, %v61, 0
    %v90 = vsel %vm79, %v62, 0
    %v93 = vsel %vm79, %v63, 0
    %v96 = vsel %vm79, %v64, 0
    %v99 = vsel %vm79, %v65, 0
    %v102 = vsel %vm79, %v66, 0
    %v105 = vsel %vm79, %v67, 0
    %v108 = vsel %vm79, %v68, 0
    %v111 = vsel %vm79, %v69, 0
    %v114 = vsel %vm79, %v70, 0
    %v117 = vsel %vm79, %v71, 0
    %v120 = vsel %vm79, %v72, 0
    %v123 = vsel %vm79, %v73, 0
    %v126 = vsel %vm79, %v74, 0
    %128 = vmatprep.subr.mxu0 0.0
    %129 = vmatpush1.msra.mxu0 %v75
    %130 = vmatprep.subr.mxu0 0.0
    %131 = vmatpush1.msra.mxu0 %v76
    %132 = vmatprep.subr.mxu0 0.0
    %133 = vmatpush1.msra.mxu0 %v77
    %134 = vmatprep.subr.mxu0 0.0
    %135 = vmatpush1.msra.mxu0 %v78
    %136 = vmatprep.subr.mxu0 0.0
    %137 = vmatpush1.msra.mxu0 0.0
    %138 = vmatprep.subr.mxu0 0.0
    %139 = vmatpush1.msra.mxu0 0.0
    %140 = vmatprep.subr.mxu0 0.0
    %141 = vmatpush1.msra.mxu0 0.0
    %142 = vmatprep.subr.mxu0 0.0
    %143 = vmatpush1.msra.mxu0 0.0
    %144 = vmatprep.subr.mxu0 0.0
    %145 = vmatpush1.msra.mxu0 0.0
    %146 = vmatprep.subr.mxu0 0.0
    %147 = vmatpush1.msra.mxu0 0.0
    %148 = vmatprep.subr.mxu0 0.0
    %149 = vmatpush1.msra.mxu0 0.0
    %150 = vmatprep.subr.mxu0 0.0
    %151 = vmatpush1.msra.mxu0 0.0
    %152 = vmatprep.subr.mxu0 0.0
    %153 = vmatpush1.msra.mxu0 0.0
    %154 = vmatprep.subr.mxu0 0.0
    %155 = vmatpush1.msra.mxu0 0.0
    %156 = vmatprep.subr.mxu0 0.0
    %157 = vmatpush1.msra.mxu0 0.0
    %158 = vmatprep.subr.mxu0 0.0
    %159 = vmatpush1.msra.mxu0 0.0
    %160 = vmatprep.subr.mxu0 0.0
    %161 = vmatpush1.msra.mxu0 0.0
    %162 = vmatprep.subr.mxu0 0.0
    %163 = vmatpush1.msra.mxu0 0.0
    %164 = vmatprep.subr.mxu0 0.0
    %165 = vmatpush1.msra.mxu0 0.0
    %166 = vmatprep.subr.mxu0 0.0
    %167 = vmatpush1.msra.mxu0 0.0
    %168 = vmatprep.subr.mxu0 0.0
    %169 = vmatpush1.msra.mxu0 0.0
    %170 = vmatprep.subr.mxu0 0.0
    %171 = vmatpush1.msra.mxu0 0.0
    %172 = vmatprep.subr.mxu0 0.0
    %173 = vmatpush1.msra.mxu0 0.0
    %174 = vmatprep.subr.mxu0 0.0
    %175 = vmatpush1.msra.mxu0 0.0
    %176 = vmatprep.subr.mxu0 0.0
    %177 = vmatpush1.msra.mxu0 0.0
    %178 = vmatprep.subr.mxu0 0.0
    %179 = vmatpush1.msra.mxu0 0.0
    %180 = vmatprep.subr.mxu0 0.0
    %181 = vmatpush1.msra.mxu0 0.0
    %182 = vmatprep.subr.mxu0 0.0
    %183 = vmatpush1.msra.mxu0 0.0
    %184 = vmatprep.subr.mxu0 0.0
    %185 = vmatpush1.msra.mxu0 0.0
    %186 = vmatprep.subr.mxu0 0.0
    %187 = vmatpush1.msra.mxu0 0.0
    %188 = vmatprep.subr.mxu0 0.0
    %189 = vmatpush1.msra.mxu0 0.0
    %190 = vmatprep.subr.mxu0 0.0
    %191 = vmatpush1.msra.mxu0 0.0
    %192 = vmatprep.mubr.f32.mxu0 0.0
    %193 = vmatmul.mubr.f32.gmra.mrb[0].mxu0 %v81
    %v194 = vpop.f32.mrb[0].mxu0
    %v195 = vadd.f32 0.0, %v194
    %v196 = vpop.f32.mrb[0].mxu0
    %197 = vmatprep.mubr.f32.mxu0 0.0
    %198 = vmatmul.mubr.f32.gmra.mrb[0].mxu0 %v84
    %v199 = vpop.f32.mrb[0].mxu0
    %v200 = vadd.f32 0.0, %v199
    %v201 = vpop.f32.mrb[0].mxu0
    %202 = vmatprep.mubr.f32.mxu0 0.0
    %203 = vmatmul.mubr.f32.gmra.mrb[0].mxu0 %v87
    %v204 = vpop.f32.mrb[0].mxu0
    %v205 = vadd.f32 0.0, %v204
    %v206 = vpop.f32.mrb[0].mxu0
    %207 = vmatprep.mubr.f32.mxu0 0.0
    %208 = vmatmul.mubr.f32.gmra.mrb[0].mxu0 %v90
    %v209 = vpop.f32.mrb[0].mxu0
    %v210 = vadd.f32 0.0, %v209
    %v211 = vpop.f32.mrb[0].mxu0
    %212 = vmatprep.mubr.f32.mxu0 0.0
    %213 = vmatmul.mubr.f32.gmra.mrb[0].mxu0 %v93
    %v214 = vpop.f32.mrb[0].mxu0
    %v215 = vadd.f32 0.0, %v214
    %v216 = vpop.f32.mrb[0].mxu0
    %217 = vmatprep.mubr.f32.mxu0 0.0
    %218 = vmatmul.mubr.f32.gmra.mrb[0].mxu0 %v96
    %v219 = vpop.f32.mrb[0].mxu0
    %v220 = vadd.f32 0.0, %v219
    %v221 = vpop.f32.mrb[0].mxu0
    %222 = vmatprep.mubr.f32.mxu0 0.0
    %223 = vmatmul.mubr.f32.gmra.mrb[0].mxu0 %v99
    %v224 = vpop.f32.mrb[0].mxu0
    %v225 = vadd.f32 0.0, %v224
    %v226 = vpop.f32.mrb[0].mxu0
    %227 = vmatprep.mubr.f32.mxu0 0.0
    %228 = vmatmul.mubr.f32.gmra.mrb[0].mxu0 %v102
    %v229 = vpop.f32.mrb[0].mxu0
    %v230 = vadd.f32 0.0, %v229
    %v231 = vpop.f32.mrb[0].mxu0
    %232 = vmatprep.mubr.f32.mxu0 0.0
    %233 = vmatmul.mubr.f32.gmra.mrb[0].mxu0 %v105
    %v234 = vpop.f32.mrb[0].mxu0
    %v235 = vadd.f32 0.0, %v234
    %v236 = vpop.f32.mrb[0].mxu0
    %237 = vmatprep.mubr.f32.mxu0 0.0
    %238 = vmatmul.mubr.f32.gmra.mrb[0].mxu0 %v108
    %v239 = vpop.f32.mrb[0].mxu0
    %v240 = vadd.f32 0.0, %v239
    %v241 = vpop.f32.mrb[0].mxu0
    %242 = vmatprep.mubr.f32.mxu0 0.0
    %243 = vmatmul.mubr.f32.gmra.mrb[0].mxu0 %v111
    %v244 = vpop.f32.mrb[0].mxu0
    %v245 = vadd.f32 0.0, %v244
    %v246 = vpop.f32.mrb[0].mxu0
    %247 = vmatprep.mubr.f32.mxu0 0.0
    %248 = vmatmul.mubr.f32.gmra.mrb[0].mxu0 %v114
    %v249 = vpop.f32.mrb[0].mxu0
    %v250 = vadd.f32 0.0, %v249
    %v251 = vpop.f32.mrb[0].mxu0
    %252 = vmatprep.mubr.f32.mxu0 0.0
    %253 = vmatmul.mubr.f32.gmra.mrb[0].mxu0 %v117
    %v254 = vpop.f32.mrb[0].mxu0
    %v255 = vadd.f32 0.0, %v254
    %v256 = vpop.f32.mrb[0].mxu0
    %257 = vmatprep.mubr.f32.mxu0 0.0
    %258 = vmatmul.mubr.f32.gmra.mrb[0].mxu0 %v120
    %v259 = vpop.f32.mrb[0].mxu0
    %v260 = vadd.f32 0.0, %v259
    %v261 = vpop.f32.mrb[0].mxu0
    %262 = vmatprep.mubr.f32.mxu0 0.0
    %263 = vmatmul.mubr.f32.gmra.mrb[0].mxu0 %v123
    %v264 = vpop.f32.mrb[0].mxu0
    %v265 = vadd.f32 0.0, %v264
    %v266 = vpop.f32.mrb[0].mxu0
    %267 = vmatprep.mubr.f32.mxu0 0.0
    %268 = vmatmul.mubr.f32.gmra.mrb[0].mxu0 %v126
    %v269 = vpop.f32.mrb[0].mxu0
    %v270 = vadd.f32 0.0, %v269
    %v271 = vpop.f32.mrb[0].mxu0
    %272 = vdwg.mxu0
    %v273 = vld [vmem:[#allocation5] sm:$0xff]
    %v274 = vld [vmem:[#allocation5 + $0x8] sm:$0xff]
    %v275 = vld [vmem:[#allocation5 + $0x10] sm:$0xff]
    %v276 = vld [vmem:[#allocation5 + $0x18] sm:$0xff]
    %v277 = vld [vmem:[#allocation5 + $0x20] sm:$0xff]
    %v278 = vld [vmem:[#allocation5 + $0x28] sm:$0xff]
    %v279 = vld [vmem:[#allocation5 + $0x30] sm:$0xff]
    %v280 = vld [vmem:[#allocation5 + $0x38] sm:$0xff]
    %v281 = vld [vmem:[#allocation5 + $0x40] sm:$0xff]
    %v282 = vld [vmem:[#allocation5 + $0x48] sm:$0xff]
    %v283 = vld [vmem:[#allocation5 + $0x50] sm:$0xff]
    %v284 = vld [vmem:[#allocation5 + $0x58] sm:$0xff]
    %v285 = vld [vmem:[#allocation5 + $0x60] sm:$0xff]
    %v286 = vld [vmem:[#allocation5 + $0x68] sm:$0xff]
    %v287 = vld [vmem:[#allocation5 + $0x70] sm:$0xff]
    %v288 = vld [vmem:[#allocation5 + $0x78] sm:$0xff]
    %v289 = vmul.f32 %v195, %v273
    %v290 = vmul.f32 %v200, %v274
    %v291 = vmul.f32 %v205, %v275
    %v292 = vmul.f32 %v210, %v276
    %v293 = vmul.f32 %v215, %v277
    %v294 = vmul.f32 %v220, %v278
    %v295 = vmul.f32 %v225, %v279
    %v296 = vmul.f32 %v230, %v280
    %v297 = vmul.f32 %v235, %v281
    %v298 = vmul.f32 %v240, %v282
    %v299 = vmul.f32 %v245, %v283
    %v300 = vmul.f32 %v250, %v284
    %v301 = vmul.f32 %v255, %v285
    %v302 = vmul.f32 %v260, %v286
    %v303 = vmul.f32 %v265, %v287
    %v304 = vmul.f32 %v270, %v288
    %v305 = vsel %vm79, %v289, 0.0
    %306 = vadd.xlane.f32.xlu0 %v305
    %v307 = vpop.xlane.xlu0 %306
    %v308 = vsel %vm79, %v290, 0.0
    %309 = vadd.xlane.f32.xlu0 %v308
    %v310 = vpop.xlane.xlu0 %309
    %v311 = vsel %vm79, %v291, 0.0
    %312 = vadd.xlane.f32.xlu0 %v311
    %v313 = vpop.xlane.xlu0 %312
    %v314 = vsel %vm79, %v292, 0.0
    %315 = vadd.xlane.f32.xlu0 %v314
    %v316 = vpop.xlane.xlu0 %315
    %v317 = vsel %vm79, %v293, 0.0
    %318 = vadd.xlane.f32.xlu0 %v317
    %v319 = vpop.xlane.xlu0 %318
    %v320 = vsel %vm79, %v294, 0.0
    %321 = vadd.xlane.f32.xlu0 %v320
    %v322 = vpop.xlane.xlu0 %321
    %v323 = vsel %vm79, %v295, 0.0
    %324 = vadd.xlane.f32.xlu0 %v323
    %v325 = vpop.xlane.xlu0 %324
    %v326 = vsel %vm79, %v296, 0.0
    %327 = vadd.xlane.f32.xlu0 %v326
    %v328 = vpop.xlane.xlu0 %327
    %v329 = vsel %vm79, %v297, 0.0
    %330 = vadd.xlane.f32.xlu0 %v329
    %v331 = vpop.xlane.xlu0 %330
    %v332 = vsel %vm79, %v298, 0.0
    %333 = vadd.xlane.f32.xlu0 %v332
    %v334 = vpop.xlane.xlu0 %333
    %v335 = vsel %vm79, %v299, 0.0
    %336 = vadd.xlane.f32.xlu0 %v335
    %v337 = vpop.xlane.xlu0 %336
    %v338 = vsel %vm79, %v300, 0.0
    %339 = vadd.xlane.f32.xlu0 %v338
    %v340 = vpop.xlane.xlu0 %339
    %v341 = vsel %vm79, %v301, 0.0
    %342 = vadd.xlane.f32.xlu0 %v341
    %v343 = vpop.xlane.xlu0 %342
    %v344 = vsel %vm79, %v302, 0.0
    %345 = vadd.xlane.f32.xlu0 %v344
    %v346 = vpop.xlane.xlu0 %345
    %v347 = vsel %vm79, %v303, 0.0
    %348 = vadd.xlane.f32.xlu0 %v347
    %v349 = vpop.xlane.xlu0 %348
    %v350 = vsel %vm79, %v304, 0.0
    %351 = vadd.xlane.f32.xlu0 %v350
    %v352 = vpop.xlane.xlu0 %351
    %s353 = sld [smem:[#allocation2]]
    %v354 = vstv %s353
    %v355 = vadd.f32 %v307, %v354
    %v356 = vadd.f32 %v310, %v354
    %v357 = vadd.f32 %v313, %v354
    %v358 = vadd.f32 %v316, %v354
    %v359 = vadd.f32 %v319, %v354
    %v360 = vadd.f32 %v322, %v354
    %v361 = vadd.f32 %v325, %v354
    %v362 = vadd.f32 %v328, %v354
    %v363 = vadd.f32 %v331, %v354
    %v364 = vadd.f32 %v334, %v354
    %v365 = vadd.f32 %v337, %v354
    %v366 = vadd.f32 %v340, %v354
    %v367 = vadd.f32 %v343, %v354
    %v368 = vadd.f32 %v346, %v354
    %v369 = vadd.f32 %v349, %v354
    %v370 = vadd.f32 %v352, %v354
    %vm371 = vcmask 7168
    %372 = vst.msk [vmem:[#allocation8] sm:$0xff] %vm371, %v355
    %373 = vst.msk [vmem:[#allocation8 + $0x8] sm:$0xff] %vm371, %v356
    %374 = vst.msk [vmem:[#allocation8 + $0x10] sm:$0xff] %vm371, %v357
    %375 = vst.msk [vmem:[#allocation8 + $0x18] sm:$0xff] %vm371, %v358
    %376 = vst.msk [vmem:[#allocation8 + $0x20] sm:$0xff] %vm371, %v359
    %377 = vst.msk [vmem:[#allocation8 + $0x28] sm:$0xff] %vm371, %v360
    %378 = vst.msk [vmem:[#allocation8 + $0x30] sm:$0xff] %vm371, %v361
    %379 = vst.msk [vmem:[#allocation8 + $0x38] sm:$0xff] %vm371, %v362
    %380 = vst.msk [vmem:[#allocation8 + $0x40] sm:$0xff] %vm371, %v363
    %381 = vst.msk [vmem:[#allocation8 + $0x48] sm:$0xff] %vm371, %v364
    %382 = vst.msk [vmem:[#allocation8 + $0x50] sm:$0xff] %vm371, %v365
    %383 = vst.msk [vmem:[#allocation8 + $0x58] sm:$0xff] %vm371, %v366
    %384 = vst.msk [vmem:[#allocation8 + $0x60] sm:$0xff] %vm371, %v367
    %385 = vst.msk [vmem:[#allocation8 + $0x68] sm:$0xff] %vm371, %v368
    %386 = vst.msk [vmem:[#allocation8 + $0x70] sm:$0xff] %vm371, %v369
    %387 = vst.msk [vmem:[#allocation8 + $0x78] sm:$0xff] %vm371, %v370
    // Predicated region
    $region30: #{tpu_custom_call.1} parent=1 // pred_check
      _
    $region31: #{tpu_custom_call.1} parent=1 // pred_check_branch
      %389 = sbr.rel (0) target = $region33
    $region32: #{tpu_custom_call.1} parent=1 // pred_region
      // Predicated region
      $region34: #{tpu_custom_call.1} parent=32 // pred_check
        _
      $region35: #{tpu_custom_call.1} parent=32 // pred_check_branch
        %391 = sbr.rel (0) target = $region37
      $region36: #{tpu_custom_call.1} parent=32 // pred_region
        // Predicated region
        $region38: #{tpu_custom_call.1} parent=36 // pred_check
          _
        $region39: #{tpu_custom_call.1} parent=36 // pred_check_branch
          %393 = sbr.rel (0) target = $region41
        $region40: #{tpu_custom_call.1} parent=36 // pred_region
          // Predicated region
          $region53: #{tpu_custom_call.1} parent=40 // pred_check
            _
          $region54: #{tpu_custom_call.1} parent=40 // pred_check_branch
            %410 = sbr.rel (0) target = $region56
          $region55: #{tpu_custom_call.1} parent=40 // pred_region
            loop: start=0, step=1, limit=1
            $region57: #{tpu_custom_call.1} parent=55 // loop_pre_header
              _
            $region58: #{tpu_custom_call.1} parent=55 // loop_header
              %s412 = sphi 0, %s416
              %p413 = scmp.ge.s32.totalorder %s412, 1
              %s417 = sphi [#allocation8], [#allocation8]
              %s418 = sphi %s4, %s4
            $region59: #{tpu_custom_call.1} parent=55 // loop_header_branch
              %415 = sbr.rel (%p413) target = $region63
            $region60: #{tpu_custom_call.1} parent=55 // loop_body
              %v419 = vld [vmem:[%s417] sm:$0xff]
              %420 = vst [vmem:[%s418] sm:$0xff] %v419
              %v421 = vld [vmem:[%s417 + $0x8] sm:$0xff]
              %422 = vst [vmem:[%s418 + $0x8] sm:$0xff] %v421
            $region61: #{tpu_custom_call.1} parent=55 // loop_footer
              %s416 = sadd.s32 1, %s412
            $region62: #{tpu_custom_call.1} parent=55 // loop_footer_branch
              %411 = sbr.rel target = $region58
            $region63: #{tpu_custom_call.1} parent=55 // loop_exit
              _
          $region56: #{tpu_custom_call.1} parent=40 // pred_fallthru
            _
          // Predicated region
          $region64: #{tpu_custom_call.1} parent=40 // pred_check
            _
          $region65: #{tpu_custom_call.1} parent=40 // pred_check_branch
            %424 = sbr.rel target = $region67
          $region66: #{tpu_custom_call.1} parent=40 // pred_region
            _
          $region67: #{tpu_custom_call.1} parent=40 // pred_fallthru
            _
        $region41: #{tpu_custom_call.1} parent=36 // pred_fallthru
          _
        // Predicated region
        $region42: #{tpu_custom_call.1} parent=36 // pred_check
          _
        $region43: #{tpu_custom_call.1} parent=36 // pred_check_branch
          %395 = sbr.rel target = $region45
        $region44: #{tpu_custom_call.1} parent=36 // pred_region
          loop: start=0, step=1, limit=1
          $region46: #{tpu_custom_call.1} parent=44 // loop_pre_header
            _
          $region47: #{tpu_custom_call.1} parent=44 // loop_header
            %s398 = sphi 0, %s402
            %p399 = scmp.ge.s32.totalorder %s398, 1
            %s403 = sphi [#allocation8], [#allocation8]
            %s404 = sphi %s4, %s4
          $region48: #{tpu_custom_call.1} parent=44 // loop_header_branch
            %401 = sbr.rel (%p399) target = $region52
          $region49: #{tpu_custom_call.1} parent=44 // loop_body
            %v405 = vld [vmem:[%s403] sm:$0xff]
            %406 = vst [vmem:[%s404] sm:$0xff] %v405
            %v407 = vld [vmem:[%s403 + $0x8] sm:$0xff]
            %408 = vst [vmem:[%s404 + $0x8] sm:$0xff] %v407
          $region50: #{tpu_custom_call.1} parent=44 // loop_footer
            %s402 = sadd.s32 1, %s398
          $region51: #{tpu_custom_call.1} parent=44 // loop_footer_branch
            %397 = sbr.rel target = $region47
          $region52: #{tpu_custom_call.1} parent=44 // loop_exit
            _
        $region45: #{tpu_custom_call.1} parent=36 // pred_fallthru
          _
      $region37: #{tpu_custom_call.1} parent=32 // pred_fallthru
        _
      %425 = vnop
    $region33: #{tpu_custom_call.1} parent=1 // pred_fallthru
      _
    // Predicated region
    $region68: #{tpu_custom_call.1} parent=1 // pred_check
      _
    $region69: #{tpu_custom_call.1} parent=1 // pred_check_branch
      %427 = sbr.rel (0) target = $region71
    $region70: #{tpu_custom_call.1} parent=1 // pred_region
      _
    $region71: #{tpu_custom_call.1} parent=1 // pred_fallthru
      _
    %428 = vsyncpa [#allocation4], 1
    %429 = vsyncpa [#allocation6], 1

</llo_original>
